<compile_context>
chip_gen: v7x
topology: tpu7x:2x2x1
jax: 0.10.0
libtpu: 0.0.40
codegen_flags: <defaults>
</compile_context>

<pallas_src>
import functools

import jax
import jax.numpy as jnp
from jax import lax
from jax.experimental import pallas as pl
from jax.experimental.pallas import tpu as pltpu

BN_EPS = 1e-5
LANE = 128
VMEM_LIMIT = 48 * 1024 * 1024  # raised above scoped default, < v7x physical 64 MiB


def _ru(v, m):
    return ((v + m - 1) // m) * m


def _pick_tm(m, cap=512):
    """Largest tile <= cap that divides m (multiple of 16), else cap (padding)."""
    if m <= cap:
        return m
    for t in range(cap, 15, -16):
        if m % t == 0:
            return t
    return cap


# --------------------------------------------------------------------------
# Fused weight-stationary matmul:  maybe_relu(A @ B + bias [+ residual])
# --------------------------------------------------------------------------

def _mm_kernel(*refs, relu, has_residual):
    if has_residual:
        a_ref, b_ref, bias_ref, r_ref, o_ref = refs
    else:
        a_ref, b_ref, bias_ref, o_ref = refs
        r_ref = None
    y = jnp.dot(a_ref[...], b_ref[...], preferred_element_type=jnp.float32)
    y = y + bias_ref[...]
    if has_residual:
        y = y + r_ref[...].astype(jnp.float32)
    if relu:
        y = jnp.maximum(y, 0.0)
    o_ref[...] = y.astype(o_ref.dtype)


def matmul_fused(A, B, bias, *, relu, residual=None, out_dtype=jnp.bfloat16,
                 cast_bf16=True):
    """Weight-stationary fused matmul.

    grid = (Nc/tn, M/tm), N axis outermost: the (K, tn) weight block index is
    unchanged across consecutive M steps, so Pallas skips its re-DMA and only
    the A tiles stream from HBM.  Full K lives in VMEM (K <= 4608 here).
    """
    M, K = A.shape
    Kb, Nc = B.shape
    assert K == Kb, (K, Kb)
    if cast_bf16 and A.dtype != jnp.bfloat16:
        A = A.astype(jnp.bfloat16)
    tn = min(512, Nc)
    while Nc % tn:
        tn //= 2
    tm = _pick_tm(M, 512)
    Mp = _ru(M, tm)
    if Mp != M:
        A = jnp.pad(A, ((0, Mp - M), (0, 0)))

    has_residual = residual is not None
    inputs = [A, B, bias]
    in_specs = [
        pl.BlockSpec((tm, K), lambda j, i: (i, 0)),
        pl.BlockSpec((K, tn), lambda j, i: (0, j)),
        pl.BlockSpec((1, tn), lambda j, i: (0, j)),
    ]
    if has_residual:
        r = residual
        if cast_bf16 and r.dtype != jnp.bfloat16:
            r = r.astype(jnp.bfloat16)
        if Mp != M:
            r = jnp.pad(r, ((0, Mp - M), (0, 0)))
        inputs.append(r)
        in_specs.append(pl.BlockSpec((tm, tn), lambda j, i: (i, j)))

    grid = (Nc // tn, Mp // tm)
    out = pl.pallas_call(
        functools.partial(_mm_kernel, relu=relu, has_residual=has_residual),
        out_shape=jax.ShapeDtypeStruct((Mp, Nc), out_dtype),
        grid_spec=pltpu.PrefetchScalarGridSpec(
            num_scalar_prefetch=0,
            grid=grid,
            in_specs=in_specs,
            out_specs=pl.BlockSpec((tm, tn), lambda j, i: (i, j)),
        ),
        compiler_params=pltpu.CompilerParams(
            dimension_semantics=("parallel", "parallel"),
            vmem_limit_bytes=VMEM_LIMIT),
        cost_estimate=pl.CostEstimate(
            flops=2 * Mp * Nc * K,
            transcendentals=0,
            bytes_accessed=int(A.size * A.dtype.itemsize
                               + B.size * B.dtype.itemsize
                               + Mp * Nc * jnp.dtype(out_dtype).itemsize)),
    )(*inputs)
    return out if Mp == M else out[:M]


# --------------------------------------------------------------------------
# 3x3 / stride-1 / pad-1 conv + bias + ReLU without materializing im2col.
# The padded image is flattened per image; tap (dh, dw) is the row-window of
# that flat buffer starting at dh*Wp + dw.  Two junk columns per output row
# (beyond Wo) are computed and sliced off afterwards.
# --------------------------------------------------------------------------

def _conv3x3_kernel(x_ref, w_ref, b_ref, o_ref, acc_ref, *, taps, mi):
    acc_ref[...] = jnp.dot(x_ref[taps[0]:taps[0] + mi, :], w_ref[0],
                           preferred_element_type=jnp.float32)
    for t in range(1, 9):
        acc_ref[...] += jnp.dot(x_ref[taps[t]:taps[t] + mi, :], w_ref[t],
                                preferred_element_type=jnp.float32)
    y = acc_ref[...] + b_ref[...]
    y = jnp.maximum(y, 0.0)
    o_ref[...] = y.astype(o_ref.dtype)


def conv3x3_s1(x, w9, bias):
    """x: (N, H, W, Cp) bf16, w9: (9, Cp, Coutp) bf16 (BN folded), bias: (1, Coutp)."""
    N, H, W, C = x.shape
    Wp = W + 2
    Mi = H * Wp                       # per-image output rows incl. junk columns
    R = (H + 3) * Wp                  # pad H by (1, 2) so every tap window is in-range
    xp = jnp.pad(x, ((0, 0), (1, 2), (1, 1), (0, 0)))
    xflat = xp.reshape(N, R, C)
    taps = tuple(dh * Wp + dw for dh in range(3) for dw in range(3))

    Coutp = w9.shape[-1]
    tn = min(512, Coutp)
    while Coutp % tn:
        tn //= 2
    grid = (Coutp // tn, N)           # weight block constant across images

    out = pl.pallas_call(
        functools.partial(_conv3x3_kernel, taps=taps, mi=Mi),
        out_shape=jax.ShapeDtypeStruct((N, Mi, Coutp), jnp.bfloat16),
        grid_spec=pltpu.PrefetchScalarGridSpec(
            num_scalar_prefetch=0,
            grid=grid,
            in_specs=[
                pl.BlockSpec((None, R, C), lambda j, n: (n, 0, 0)),
                pl.BlockSpec((9, C, tn), lambda j, n: (0, 0, j)),
                pl.BlockSpec((1, tn), lambda j, n: (0, j)),
            ],
            out_specs=pl.BlockSpec((None, Mi, tn), lambda j, n: (n, 0, j)),
            scratch_shapes=[pltpu.VMEM((Mi, tn), jnp.float32)],
        ),
        compiler_params=pltpu.CompilerParams(
            dimension_semantics=("parallel", "parallel"),
            vmem_limit_bytes=VMEM_LIMIT),
        cost_estimate=pl.CostEstimate(
            flops=2 * N * Mi * C * Coutp * 9,
            transcendentals=0,
            bytes_accessed=int(xflat.size * 2 + w9.size * 2 + N * Mi * Coutp * 2)),
    )(xflat, w9, bias)
    return out.reshape(N, H, Wp, Coutp)[:, :, :W, :]


# --------------------------------------------------------------------------
# MaxPool2d(kernel=3, stride=2, padding=1) — one kernel per image, no slabs.
# Column parity is folded into the lane dim (2C = 256 lanes -> lane-dense).
# --------------------------------------------------------------------------

def _maxpool_kernel(x_ref, o_ref, *, ho, wo, c):
    def body(h, carry):
        r0 = x_ref[2 * h]
        r1 = x_ref[2 * h + 1]
        r2 = x_ref[2 * h + 2]
        rm = jnp.maximum(jnp.maximum(r0, r1), r2)          # (Wo+1, 2C)
        row = jnp.maximum(jnp.maximum(rm[0:wo, 0:c], rm[0:wo, c:2 * c]),
                          rm[1:wo + 1, 0:c])               # (Wo, C)
        o_ref[h] = row
        return carry

    lax.fori_loop(0, ho, body, 0)


def maxpool_3x3_s2_p1(x):
    N, H, W, C = x.shape
    Ho = (H - 1) // 2 + 1
    Wo = (W - 1) // 2 + 1
    pad_b = max(0, 2 * Ho - H)        # padded rows 0 .. 2*Ho reachable
    pad_r = 2 * Wo + 1 - W            # padded width = 2*(Wo+1), even
    neg = jnp.asarray(jnp.finfo(x.dtype).min, x.dtype)
    xp = jnp.pad(x, ((0, 0), (1, pad_b), (1, pad_r), (0, 0)), constant_values=neg)
    Hp = H + 1 + pad_b
    Wsp = (W + 1 + pad_r) // 2
    xsp = xp.reshape(N, Hp, Wsp, 2 * C)   # free reshape: fold column parity into lanes

    return pl.pallas_call(
        functools.partial(_maxpool_kernel, ho=Ho, wo=Wo, c=C),
        out_shape=jax.ShapeDtypeStruct((N, Ho, Wo, C), x.dtype),
        grid_spec=pltpu.PrefetchScalarGridSpec(
            num_scalar_prefetch=0,
            grid=(N,),
            in_specs=[pl.BlockSpec((None, Hp, Wsp, 2 * C), lambda n: (n, 0, 0, 0))],
            out_specs=pl.BlockSpec((None, Ho, Wo, C), lambda n: (n, 0, 0, 0)),
        ),
        compiler_params=pltpu.CompilerParams(
            dimension_semantics=("parallel",),
            vmem_limit_bytes=VMEM_LIMIT),
    )(xsp)


# --------------------------------------------------------------------------
# Conv wrappers (im2col fallback only for the stem + three stride-2 3x3 convs)
# --------------------------------------------------------------------------

def conv1x1(x, w, b, *, relu, residual=None, stride=1):
    if stride != 1:
        x = x[:, ::stride, ::stride, :]
    N, H, W, C = x.shape
    A = x.reshape(N * H * W, C)
    r = None if residual is None else residual.reshape(N * H * W, -1)
    out = matmul_fused(A, w, b, relu=relu, residual=r)
    return out.reshape(N, H, W, -1)


def conv_im2col(x, w_flat, b, *, kh, kw, stride, pad, relu):
    N, H, W, C = x.shape
    Ho = (H + 2 * pad - kh) // stride + 1
    Wo = (W + 2 * pad - kw) // stride + 1
    xp = jnp.pad(x, ((0, 0), (pad, pad), (pad, pad), (0, 0))) if pad else x
    cols = [xp[:, i:i + stride * Ho:stride, j:j + stride * Wo:stride, :]
            for i in range(kh) for j in range(kw)]
    patches = cols[0] if len(cols) == 1 else jnp.concatenate(cols, axis=-1)
    A = patches.reshape(N * Ho * Wo, kh * kw * C)
    out = matmul_fused(A, w_flat, b, relu=relu)
    return out.reshape(N, Ho, Wo, -1)


@functools.partial(jax.jit, static_argnames=("stride",))
def bottleneck(x, w1, b1, w2, b2, w3, b3, wd, bd, *, stride):
    out = conv1x1(x, w1, b1, relu=True)
    if stride == 1:
        out = conv3x3_s1(out, w2, b2)
    else:
        out = conv_im2col(out, w2, b2, kh=3, kw=3, stride=stride, pad=1, relu=True)
    if wd is not None:
        identity = conv1x1(x, wd, bd, relu=False, stride=stride)
    else:
        identity = x
    # conv3 + BN + residual add + final ReLU fused in one kernel epilogue
    return conv1x1(out, w3, b3, relu=True, residual=identity)


def resnet101_forward(x_nchw, params):
    x = jnp.transpose(x_nchw, (0, 2, 3, 1)).astype(jnp.bfloat16)   # NCHW -> NHWC
    x = conv_im2col(x, params["stem_w"], params["stem_b"],
                    kh=7, kw=7, stride=2, pad=3, relu=True)
    x = maxpool_3x3_s2_p1(x)
    for layer in params["layers"]:
        for blk in layer:
            x = bottleneck(x, blk["w1"], blk["b1"], blk["w2"], blk["b2"],
                           blk["w3"], blk["b3"], blk.get("wd"), blk.get("bd"),
                           stride=blk["stride"])
    feat = jnp.mean(x.astype(jnp.float32), axis=(1, 2))             # global avg pool
    logits = matmul_fused(feat, params["fc_w"], params["fc_b"],
                          relu=False, out_dtype=jnp.float32, cast_bf16=False)
    return logits[:, :params["num_classes"]]


# --------------------------------------------------------------------------
# Deterministic synthetic parameters (resnet101 shapes), prepped once:
# BN scale folded into weights, channel dims padded to 128, bf16 cast.
# --------------------------------------------------------------------------

class _ParamGen:
    def __init__(self, key):
        self._key = key
        self._i = 0

    def _next(self):
        self._i += 1
        return jax.random.fold_in(self._key, self._i)

    def conv(self, kh, kw, cin, cout):
        fan_in = kh * kw * cin
        return (jax.random.normal(self._next(), (kh, kw, cin, cout), jnp.float32)
                * (2.0 / fan_in) ** 0.5)

    def bn(self, c):
        gamma = 1.0 + 0.1 * jax.random.normal(self._next(), (c,), jnp.float32)
        beta = 0.1 * jax.random.normal(self._next(), (c,), jnp.float32)
        mean = 0.1 * jax.random.normal(self._next(), (c,), jnp.float32)
        var = 1.0 + 0.1 * jnp.abs(jax.random.normal(self._next(), (c,), jnp.float32))
        scale = gamma / jnp.sqrt(var + BN_EPS)
        bias = beta - mean * scale
        return scale, bias

    def linear(self, cin, cout):
        w = jax.random.normal(self._next(), (cin, cout), jnp.float32) * (1.0 / cin) ** 0.5
        b = 0.01 * jax.random.normal(self._next(), (cout,), jnp.float32)
        return w, b


def _fold_pad_conv(w, bn, cin_pad, *, as_taps):
    """Fold frozen-BN scale into w, pad Cin/Cout to padded widths, cast to bf16."""
    scale, bias = bn
    kh, kw, cin, cout = w.shape
    coutp = _ru(cout, LANE)
    wf = w * scale
    wf = jnp.pad(wf, ((0, 0), (0, 0), (0, cin_pad - cin), (0, coutp - cout)))
    b = jnp.pad(bias, (0, coutp - cout)).astype(jnp.float32).reshape(1, coutp)
    if as_taps:
        wq = wf.reshape(kh * kw, cin_pad, coutp).astype(jnp.bfloat16)
    else:
        wq = wf.reshape(kh * kw * cin_pad, coutp).astype(jnp.bfloat16)
    return wq, b


def make_resnet101_params(key, num_classes):
    g = _ParamGen(key)
    cpad = lambda c: _ru(c, LANE)

    sw, sb = _fold_pad_conv(g.conv(7, 7, 3, 64), g.bn(64), 3, as_taps=False)
    params = {"stem_w": sw, "stem_b": sb, "num_classes": num_classes}

    layers = []
    inplanes = 64
    # ResNet101 block counts: (3, 4, 23, 3)
    for planes, blocks, stride in [(64, 3, 1), (128, 4, 2), (256, 23, 2), (512, 3, 2)]:
        layer = []
        for bidx in range(blocks):
            s = stride if bidx == 0 else 1
            w1, b1 = _fold_pad_conv(g.conv(1, 1, inplanes, planes), g.bn(planes),
                                    cpad(inplanes), as_taps=False)
            w2, b2 = _fold_pad_conv(g.conv(3, 3, planes, planes), g.bn(planes),
                                    cpad(planes), as_taps=(s == 1))
            w3, b3 = _fold_pad_conv(g.conv(1, 1, planes, planes * 4),
                                    g.bn(planes * 4), cpad(planes), as_taps=False)
            blk = {"stride": s, "w1": w1, "b1": b1, "w2": w2, "b2": b2,
                   "w3": w3, "b3": b3}
            if s != 1 or inplanes != planes * 4:
                wd, bd = _fold_pad_conv(g.conv(1, 1, inplanes, planes * 4),
                                        g.bn(planes * 4), cpad(inplanes),
                                        as_taps=False)
                blk["wd"], blk["bd"] = wd, bd
            layer.append(blk)
            inplanes = planes * 4
        layers.append(layer)
    params["layers"] = layers

    fw, fb = g.linear(2048, num_classes)
    ncp = _ru(num_classes, LANE)
    params["fc_w"] = jnp.pad(fw, ((0, 0), (0, ncp - num_classes))).astype(jnp.float32)
    params["fc_b"] = jnp.pad(fb, (0, ncp - num_classes)).astype(jnp.float32).reshape(1, ncp)
    return params


if __name__ == "__main__":
    key = jax.random.PRNGKey(0)
    num_classes = 10
    params = make_resnet101_params(jax.random.fold_in(key, 1), num_classes)
    # Small-but-valid ResNet input: 32x32 survives the 32x total downsample.
    x = jax.random.normal(jax.random.fold_in(key, 2), (2, 3, 32, 32), jnp.float32)

    logits = resnet101_forward(x, params)
    logits = jax.block_until_ready(logits)

    assert logits.shape == (2, num_classes), logits.shape
    assert bool(jnp.all(jnp.isfinite(logits)))
    print("KERNEL_OK")
</pallas_src>

<mosaic_0001>
module attributes {stable_mosaic.version = 11 : i64} {
  func.func @_mm_kernel(%arg0: i32, %arg1: i32, %arg2: memref<512x147xbf16, #tpu.memory_space<vmem>>, %arg3: memref<147x128xbf16, #tpu.memory_space<vmem>>, %arg4: memref<1x128xf32, #tpu.memory_space<vmem>>, %arg5: memref<512x128xbf16, #tpu.memory_space<vmem>>) attributes {dimension_semantics = [#tpu.dimension_semantics<parallel>, #tpu.dimension_semantics<parallel>], iteration_bounds = array<i64: 1, 1>, scalar_prefetch = 0 : i64, scratch_operands = 0 : i64, tpu.core_type = #tpu.core_type<tc>, window_params = [{transform_indices = @transform_0, window_bounds = array<i64: 512, 147>}, {transform_indices = @transform_1, window_bounds = array<i64: 147, 128>}, {transform_indices = @transform_2, window_bounds = array<i64: 1, 128>}, {transform_indices = @transform_3, window_bounds = array<i64: 512, 128>}]} {
    %c0 = arith.constant 0 : index
    %c0_0 = arith.constant 0 : index
    %0 = vector.load %arg2[%c0, %c0_0] : memref<512x147xbf16, #tpu.memory_space<vmem>>, vector<512x147xbf16>
    %c0_1 = arith.constant 0 : index
    %c0_2 = arith.constant 0 : index
    %1 = vector.load %arg3[%c0_1, %c0_2] : memref<147x128xbf16, #tpu.memory_space<vmem>>, vector<147x128xbf16>
    %cst = arith.constant dense<0.000000e+00> : vector<512x128xf32>
    %2 = tpu.matmul %0, %1, %cst {dimension_numbers = #tpu.dot_dimension_numbers<[1], [0], [0], [1], [0, 0, 1, 1], [], []>} : vector<512x147xbf16>, vector<147x128xbf16>, vector<512x128xf32> -> vector<512x128xf32>
    %c0_3 = arith.constant 0 : index
    %c0_4 = arith.constant 0 : index
    %3 = vector.load %arg4[%c0_3, %c0_4] : memref<1x128xf32, #tpu.memory_space<vmem>>, vector<1x128xf32>
    %4 = vector.broadcast %3 : vector<1x128xf32> to vector<512x128xf32>
    %5 = arith.addf %2, %4 : vector<512x128xf32>
    %cst_5 = arith.constant 0.000000e+00 : f32
    %6 = vector.broadcast %cst_5 : f32 to vector<512x128xf32>
    %7 = arith.maximumf %5, %6 : vector<512x128xf32>
    %8 = arith.truncf %7 : vector<512x128xf32> to vector<512x128xbf16>
    %c0_6 = arith.constant 0 : index
    %c0_7 = arith.constant 0 : index
    %9 = vector.load %arg5[%c0_6, %c0_7] : memref<512x128xbf16, #tpu.memory_space<vmem>>, vector<512x128xbf16>
    tpu.vector_store %arg5[%c0_6, %c0_7], %8 {strides = array<i32>} : memref<512x128xbf16, #tpu.memory_space<vmem>>, vector<512x128xbf16>,
    return
  }
  func.func @transform_0(%arg0: i32, %arg1: i32) -> (i32, i32) {
    %c0_i32 = arith.constant 0 : i32
    %c0_i32_0 = arith.constant 0 : i32
    return %arg1, %c0_i32 : i32, i32
  }
  func.func @transform_1(%arg0: i32, %arg1: i32) -> (i32, i32) {
    %c0_i32 = arith.constant 0 : i32
    %c0_i32_0 = arith.constant 0 : i32
    return %c0_i32, %arg0 : i32, i32
  }
  func.func @transform_2(%arg0: i32, %arg1: i32) -> (i32, i32) {
    %c0_i32 = arith.constant 0 : i32
    %c0_i32_0 = arith.constant 0 : i32
    return %c0_i32, %arg0 : i32, i32
  }
  func.func @transform_3(%arg0: i32, %arg1: i32) -> (i32, i32) {
    %c0_i32 = arith.constant 0 : i32
    return %arg1, %arg0 : i32, i32
  }
}

</mosaic_0001>

<llo_original>
// kernel: tpu_custom_call.1
$region0: #{tpu_custom_call.1}
  #allocation0 [shape = 'u32[]', space=smem, size = 0x4, offset = 0x4, fixed_abs, tag = 'smem constant byte address 0x4 - core index']
  #allocation1 [shape = 'u32[144,128]{1,0:T(1,128)}', space=vmem, size = 0x12000, scoped, tag = 'internal scratch']
  %s0 = inlined_call_operand.vmem [shape: bf16[512,147], index: 0, kind: input, shape index: {}]
  %s1 = inlined_call_operand.vmem [shape: bf16[147,128], index: 1, kind: input, shape index: {}]
  %s2 = inlined_call_operand.vmem [shape: f32[1,128], index: 2, kind: input, shape index: {}]
  %s3 = inlined_call_operand.hbm [shape: bf16[512,128], index: 3, kind: output, shape index: {}]
  %s4 = sld [smem:[#allocation0]]
  $region22: #{tpu_custom_call.1} parent=0
    _
  %s6 = ssub.s32 1, %s4
  %s7 = scalar_select 0, %s6, %s4
  $region1: #{tpu_custom_call.1} parent=0
    #allocation2 [shape = 'u8[131072]{0}', space=vmem, size = 0x20000, scoped, tag = 'output window, operand 0, single buffered']
    #allocation3 [shape = 's32[1]{0}', space=sflag, size = 0x4, scoped, tag = 'scoped memory for tpu_custom_call.1']
    %8 = vsyncpa [#allocation3], 0
    // Predicated region
    $region2: #{tpu_custom_call.1} parent=1 // pred_check
      _
    $region3: #{tpu_custom_call.1} parent=1 // pred_check_branch
      %10 = sbr.rel (0) target = $region5
    $region4: #{tpu_custom_call.1} parent=1 // pred_region
      _
    $region5: #{tpu_custom_call.1} parent=1 // pred_fallthru
      _
    // Predicated region
    $region6: #{tpu_custom_call.1} parent=1 // pred_check
      _
    $region7: #{tpu_custom_call.1} parent=1 // pred_check_branch
      %12 = sbr.rel (0) target = $region9
    $region8: #{tpu_custom_call.1} parent=1 // pred_region
      _
    $region9: #{tpu_custom_call.1} parent=1 // pred_fallthru
      _
    // Predicated region
    $region10: #{tpu_custom_call.1} parent=1 // pred_check
      _
    $region11: #{tpu_custom_call.1} parent=1 // pred_check_branch
      %14 = sbr.rel (0) target = $region13
    $region12: #{tpu_custom_call.1} parent=1 // pred_region
      _
    $region13: #{tpu_custom_call.1} parent=1 // pred_fallthru
      _
    %v16 = vld [vmem:[%s0] sm:$0xff]
    %v17 = vld [vmem:[%s0 + $0x8] sm:$0xff]
    %v18 = vld [vmem:[%s0 + $0x10] sm:$0xff]
    %v19 = vld [vmem:[%s0 + $0x18] sm:$0xff]
    %v20 = vld [vmem:[%s0 + $0x20] sm:$0xff]
    %v21 = vld [vmem:[%s0 + $0x28] sm:$0xff]
    %v22 = vld [vmem:[%s0 + $0x30] sm:$0xff]
    %v23 = vld [vmem:[%s0 + $0x38] sm:$0xff]
    %v24 = vld [vmem:[%s0 + $0x40] sm:$0xff]
    %v25 = vld [vmem:[%s0 + $0x48] sm:$0xff]
    %v26 = vld [vmem:[%s0 + $0x50] sm:$0xff]
    %v27 = vld [vmem:[%s0 + $0x58] sm:$0xff]
    %v28 = vld [vmem:[%s0 + $0x60] sm:$0xff]
    %v29 = vld [vmem:[%s0 + $0x68] sm:$0xff]
    %v30 = vld [vmem:[%s0 + $0x70] sm:$0xff]
    %v31 = vld [vmem:[%s0 + $0x78] sm:$0xff]
    %v32 = vld [vmem:[%s0 + $0x80] sm:$0xff]
    %v33 = vld [vmem:[%s0 + $0x88] sm:$0xff]
    %v34 = vld [vmem:[%s0 + $0x90] sm:$0xff]
    %v35 = vld [vmem:[%s0 + $0x98] sm:$0xff]
    %v36 = vld [vmem:[%s0 + $0xa0] sm:$0xff]
    %v37 = vld [vmem:[%s0 + $0xa8] sm:$0xff]
    %v38 = vld [vmem:[%s0 + $0xb0] sm:$0xff]
    %v39 = vld [vmem:[%s0 + $0xb8] sm:$0xff]
    %v40 = vld [vmem:[%s0 + $0xc0] sm:$0xff]
    %v41 = vld [vmem:[%s0 + $0xc8] sm:$0xff]
    %v42 = vld [vmem:[%s0 + $0xd0] sm:$0xff]
    %v43 = vld [vmem:[%s0 + $0xd8] sm:$0xff]
    %v44 = vld [vmem:[%s0 + $0xe0] sm:$0xff]
    %v45 = vld [vmem:[%s0 + $0xe8] sm:$0xff]
    %v46 = vld [vmem:[%s0 + $0xf0] sm:$0xff]
    %v47 = vld [vmem:[%s0 + $0xf8] sm:$0xff]
    %v48 = vld [vmem:[%s0 + $0x100] sm:$0xff]
    %v49 = vld [vmem:[%s0 + $0x108] sm:$0xff]
    %v50 = vld [vmem:[%s0 + $0x110] sm:$0xff]
    %v51 = vld [vmem:[%s0 + $0x118] sm:$0xff]
    %v52 = vld [vmem:[%s0 + $0x120] sm:$0xff]
    %v53 = vld [vmem:[%s0 + $0x128] sm:$0xff]
    %v54 = vld [vmem:[%s0 + $0x130] sm:$0xff]
    %v55 = vld [vmem:[%s0 + $0x138] sm:$0xff]
    %v56 = vld [vmem:[%s0 + $0x140] sm:$0xff]
    %v57 = vld [vmem:[%s0 + $0x148] sm:$0xff]
    %v58 = vld [vmem:[%s0 + $0x150] sm:$0xff]
    %v59 = vld [vmem:[%s0 + $0x158] sm:$0xff]
    %v60 = vld [vmem:[%s0 + $0x160] sm:$0xff]
    %v61 = vld [vmem:[%s0 + $0x168] sm:$0xff]
    %v62 = vld [vmem:[%s0 + $0x170] sm:$0xff]
    %v63 = vld [vmem:[%s0 + $0x178] sm:$0xff]
    %v64 = vld [vmem:[%s0 + $0x180] sm:$0xff]
    %v65 = vld [vmem:[%s0 + $0x188] sm:$0xff]
    %v66 = vld [vmem:[%s0 + $0x190] sm:$0xff]
    %v67 = vld [vmem:[%s0 + $0x198] sm:$0xff]
    %v68 = vld [vmem:[%s0 + $0x1a0] sm:$0xff]
    %v69 = vld [vmem:[%s0 + $0x1a8] sm:$0xff]
    %v70 = vld [vmem:[%s0 + $0x1b0] sm:$0xff]
    %v71 = vld [vmem:[%s0 + $0x1b8] sm:$0xff]
    %v72 = vld [vmem:[%s0 + $0x1c0] sm:$0xff]
    %v73 = vld [vmem:[%s0 + $0x1c8] sm:$0xff]
    %v74 = vld [vmem:[%s0 + $0x1d0] sm:$0xff]
    %v75 = vld [vmem:[%s0 + $0x1d8] sm:$0xff]
    %v76 = vld [vmem:[%s0 + $0x1e0] sm:$0xff]
    %v77 = vld [vmem:[%s0 + $0x1e8] sm:$0xff]
    %v78 = vld [vmem:[%s0 + $0x1f0] sm:$0xff]
    %v79 = vld [vmem:[%s0 + $0x1f8] sm:$0xff]
    %v80 = vld [vmem:[%s1] sm:$0xf]
    %v81 = vld [vmem:[%s1 + $0x4] sm:$0xf]
    %v82 = vld [vmem:[%s1 + $0x8] sm:$0xf]
    %v83 = vld [vmem:[%s1 + $0xc] sm:$0xf]
    %v84 = vld [vmem:[%s1 + $0x10] sm:$0xf]
    %v85 = vld [vmem:[%s1 + $0x14] sm:$0xf]
    %v86 = vld [vmem:[%s1 + $0x18] sm:$0xf]
    %v87 = vld [vmem:[%s1 + $0x1c] sm:$0xf]
    %v88 = vld [vmem:[%s1 + $0x20] sm:$0xf]
    %v89 = vld [vmem:[%s1 + $0x24] sm:$0xf]
    %v90 = vld [vmem:[%s1 + $0x28] sm:$0xf]
    %v91 = vld [vmem:[%s1 + $0x2c] sm:$0xf]
    %v92 = vld [vmem:[%s1 + $0x30] sm:$0xf]
    %v93 = vld [vmem:[%s1 + $0x34] sm:$0xf]
    %v94 = vld [vmem:[%s1 + $0x38] sm:$0xf]
    %v95 = vld [vmem:[%s1 + $0x3c] sm:$0xf]
    %v96 = vld [vmem:[%s1 + $0x40] sm:$0xf]
    %v97 = vld [vmem:[%s1 + $0x44] sm:$0xf]
    %v98 = vld [vmem:[%s1 + $0x48] sm:$0x3]
    %v99 = vld [vmem:[%s2] sm:$0x1]
    %v101 = vlaneseq
    %v102 = vshrl.u32 %v101, 7
    %v103 = vsub.s32 0, %v102
    %v104 = vrot.slane %v99, %v103
    %v170 = vunpack.c.l.b16 %v16
    %v171 = vunpack.c.h.b16 %v16
    %v172 = vunpack.c.l.b16 %v17
    %v173 = vunpack.c.h.b16 %v17
    %v174 = vunpack.c.l.b16 %v18
    %v175 = vunpack.c.h.b16 %v18
    %v176 = vunpack.c.l.b16 %v19
    %v177 = vunpack.c.h.b16 %v19
    %v178 = vunpack.c.l.b16 %v20
    %v179 = vunpack.c.h.b16 %v20
    %v180 = vunpack.c.l.b16 %v21
    %v181 = vunpack.c.h.b16 %v21
    %v182 = vunpack.c.l.b16 %v22
    %v183 = vunpack.c.h.b16 %v22
    %v184 = vunpack.c.l.b16 %v23
    %v185 = vunpack.c.h.b16 %v23
    %v186 = vunpack.c.l.b16 %v24
    %v187 = vunpack.c.h.b16 %v24
    %v188 = vunpack.c.l.b16 %v25
    %v189 = vunpack.c.h.b16 %v25
    %v190 = vunpack.c.l.b16 %v26
    %v191 = vunpack.c.h.b16 %v26
    %v192 = vunpack.c.l.b16 %v27
    %v193 = vunpack.c.h.b16 %v27
    %v194 = vunpack.c.l.b16 %v28
    %v195 = vunpack.c.h.b16 %v28
    %v196 = vunpack.c.l.b16 %v29
    %v197 = vunpack.c.h.b16 %v29
    %v198 = vunpack.c.l.b16 %v30
    %v199 = vunpack.c.h.b16 %v30
    %v200 = vunpack.c.l.b16 %v31
    %v201 = vunpack.c.h.b16 %v31
    %v202 = vunpack.c.l.b16 %v32
    %v203 = vunpack.c.h.b16 %v32
    %v204 = vunpack.c.l.b16 %v33
    %v205 = vunpack.c.h.b16 %v33
    %v206 = vunpack.c.l.b16 %v34
    %v207 = vunpack.c.h.b16 %v34
    %v208 = vunpack.c.l.b16 %v35
    %v209 = vunpack.c.h.b16 %v35
    %v210 = vunpack.c.l.b16 %v36
    %v211 = vunpack.c.h.b16 %v36
    %v212 = vunpack.c.l.b16 %v37
    %v213 = vunpack.c.h.b16 %v37
    %v214 = vunpack.c.l.b16 %v38
    %v215 = vunpack.c.h.b16 %v38
    %v216 = vunpack.c.l.b16 %v39
    %v217 = vunpack.c.h.b16 %v39
    %v218 = vunpack.c.l.b16 %v40
    %v219 = vunpack.c.h.b16 %v40
    %v220 = vunpack.c.l.b16 %v41
    %v221 = vunpack.c.h.b16 %v41
    %v222 = vunpack.c.l.b16 %v42
    %v223 = vunpack.c.h.b16 %v42
    %v224 = vunpack.c.l.b16 %v43
    %v225 = vunpack.c.h.b16 %v43
    %v226 = vunpack.c.l.b16 %v44
    %v227 = vunpack.c.h.b16 %v44
    %v228 = vunpack.c.l.b16 %v45
    %v229 = vunpack.c.h.b16 %v45
    %v230 = vunpack.c.l.b16 %v46
    %v231 = vunpack.c.h.b16 %v46
    %v232 = vunpack.c.l.b16 %v47
    %v233 = vunpack.c.h.b16 %v47
    %v234 = vunpack.c.l.b16 %v48
    %v235 = vunpack.c.h.b16 %v48
    %v236 = vunpack.c.l.b16 %v49
    %v237 = vunpack.c.h.b16 %v49
    %v238 = vunpack.c.l.b16 %v50
    %v239 = vunpack.c.h.b16 %v50
    %v240 = vunpack.c.l.b16 %v51
    %v241 = vunpack.c.h.b16 %v51
    %v242 = vunpack.c.l.b16 %v52
    %v243 = vunpack.c.h.b16 %v52
    %v244 = vunpack.c.l.b16 %v53
    %v245 = vunpack.c.h.b16 %v53
    %v246 = vunpack.c.l.b16 %v54
    %v247 = vunpack.c.h.b16 %v54
    %v248 = vunpack.c.l.b16 %v55
    %v249 = vunpack.c.h.b16 %v55
    %v250 = vunpack.c.l.b16 %v56
    %v251 = vunpack.c.h.b16 %v56
    %v252 = vunpack.c.l.b16 %v57
    %v253 = vunpack.c.h.b16 %v57
    %v254 = vunpack.c.l.b16 %v58
    %v255 = vunpack.c.h.b16 %v58
    %v256 = vunpack.c.l.b16 %v59
    %v257 = vunpack.c.h.b16 %v59
    %v258 = vunpack.c.l.b16 %v60
    %v259 = vunpack.c.h.b16 %v60
    %v260 = vunpack.c.l.b16 %v61
    %v261 = vunpack.c.h.b16 %v61
    %v262 = vunpack.c.l.b16 %v62
    %v263 = vunpack.c.h.b16 %v62
    %v264 = vunpack.c.l.b16 %v63
    %v265 = vunpack.c.h.b16 %v63
    %v266 = vunpack.c.l.b16 %v64
    %v267 = vunpack.c.h.b16 %v64
    %v268 = vunpack.c.l.b16 %v65
    %v269 = vunpack.c.h.b16 %v65
    %v270 = vunpack.c.l.b16 %v66
    %v271 = vunpack.c.h.b16 %v66
    %v272 = vunpack.c.l.b16 %v67
    %v273 = vunpack.c.h.b16 %v67
    %v274 = vunpack.c.l.b16 %v68
    %v275 = vunpack.c.h.b16 %v68
    %v276 = vunpack.c.l.b16 %v69
    %v277 = vunpack.c.h.b16 %v69
    %v278 = vunpack.c.l.b16 %v70
    %v279 = vunpack.c.h.b16 %v70
    %v280 = vunpack.c.l.b16 %v71
    %v281 = vunpack.c.h.b16 %v71
    %v282 = vunpack.c.l.b16 %v72
    %v283 = vunpack.c.h.b16 %v72
    %v284 = vunpack.c.l.b16 %v73
    %v285 = vunpack.c.h.b16 %v73
    %v286 = vunpack.c.l.b16 %v74
    %v287 = vunpack.c.h.b16 %v74
    %v288 = vunpack.c.l.b16 %v75
    %v289 = vunpack.c.h.b16 %v75
    %v290 = vunpack.c.l.b16 %v76
    %v291 = vunpack.c.h.b16 %v76
    %v292 = vunpack.c.l.b16 %v77
    %v293 = vunpack.c.h.b16 %v77
    %v294 = vunpack.c.l.b16 %v78
    %v295 = vunpack.c.h.b16 %v78
    %v296 = vunpack.c.l.b16 %v79
    %v297 = vunpack.c.h.b16 %v79
    %v298 = vpack.c.b16 %v172, %v170
    %v299 = vpack.c.b16 %v173, %v171
    %v300 = vpack.c.b16 %v176, %v174
    %v301 = vpack.c.b16 %v177, %v175
    %v302 = vpack.c.b16 %v180, %v178
    %v303 = vpack.c.b16 %v181, %v179
    %v304 = vpack.c.b16 %v184, %v182
    %v305 = vpack.c.b16 %v185, %v183
    %v306 = vpack.c.b16 %v188, %v186
    %v307 = vpack.c.b16 %v189, %v187
    %v308 = vpack.c.b16 %v192, %v190
    %v309 = vpack.c.b16 %v193, %v191
    %v310 = vpack.c.b16 %v196, %v194
    %v311 = vpack.c.b16 %v197, %v195
    %v312 = vpack.c.b16 %v200, %v198
    %v313 = vpack.c.b16 %v201, %v199
    %v314 = vpack.c.b16 %v204, %v202
    %v315 = vpack.c.b16 %v205, %v203
    %v316 = vpack.c.b16 %v208, %v206
    %v317 = vpack.c.b16 %v209, %v207
    %v318 = vpack.c.b16 %v212, %v210
    %v319 = vpack.c.b16 %v213, %v211
    %v320 = vpack.c.b16 %v216, %v214
    %v321 = vpack.c.b16 %v217, %v215
    %v322 = vpack.c.b16 %v220, %v218
    %v323 = vpack.c.b16 %v221, %v219
    %v324 = vpack.c.b16 %v224, %v222
    %v325 = vpack.c.b16 %v225, %v223
    %v326 = vpack.c.b16 %v228, %v226
    %v327 = vpack.c.b16 %v229, %v227
    %v328 = vpack.c.b16 %v232, %v230
    %v329 = vpack.c.b16 %v233, %v231
    %v330 = vpack.c.b16 %v236, %v234
    %v331 = vpack.c.b16 %v237, %v235
    %v332 = vpack.c.b16 %v240, %v238
    %v333 = vpack.c.b16 %v241, %v239
    %v334 = vpack.c.b16 %v244, %v242
    %v335 = vpack.c.b16 %v245, %v243
    %v336 = vpack.c.b16 %v248, %v246
    %v337 = vpack.c.b16 %v249, %v247
    %v338 = vpack.c.b16 %v252, %v250
    %v339 = vpack.c.b16 %v253, %v251
    %v340 = vpack.c.b16 %v256, %v254
    %v341 = vpack.c.b16 %v257, %v255
    %v342 = vpack.c.b16 %v260, %v258
    %v343 = vpack.c.b16 %v261, %v259
    %v344 = vpack.c.b16 %v264, %v262
    %v345 = vpack.c.b16 %v265, %v263
    %v346 = vpack.c.b16 %v268, %v266
    %v347 = vpack.c.b16 %v269, %v267
    %v348 = vpack.c.b16 %v272, %v270
    %v349 = vpack.c.b16 %v273, %v271
    %v350 = vpack.c.b16 %v276, %v274
    %v351 = vpack.c.b16 %v277, %v275
    %v352 = vpack.c.b16 %v280, %v278
    %v353 = vpack.c.b16 %v281, %v279
    %v354 = vpack.c.b16 %v284, %v282
    %v355 = vpack.c.b16 %v285, %v283
    %v356 = vpack.c.b16 %v288, %v286
    %v357 = vpack.c.b16 %v289, %v287
    %v358 = vpack.c.b16 %v292, %v290
    %v359 = vpack.c.b16 %v293, %v291
    %v360 = vpack.c.b16 %v296, %v294
    %v361 = vpack.c.b16 %v297, %v295
    %v413 = vunpack.c.l.b16 %v80
    %v414 = vunpack.c.l.b16 %v81
    %v415 = vunpack.c.l.b16 %v82
    %v416 = vunpack.c.l.b16 %v83
    %v417 = vunpack.c.l.b16 %v84
    %v418 = vunpack.c.l.b16 %v85
    %v419 = vunpack.c.l.b16 %v86
    %v420 = vunpack.c.l.b16 %v87
    %v421 = vunpack.c.l.b16 %v88
    %v422 = vunpack.c.l.b16 %v89
    %v423 = vunpack.c.l.b16 %v90
    %v424 = vunpack.c.l.b16 %v91
    %v425 = vunpack.c.l.b16 %v92
    %v426 = vunpack.c.l.b16 %v93
    %v427 = vunpack.c.l.b16 %v94
    %v428 = vunpack.c.l.b16 %v95
    %v429 = vunpack.c.l.b16 %v96
    %v430 = vunpack.c.l.b16 %v97
    %v431 = vunpack.c.l.b16 %v98
    %v432 = vpack.c.b16 %v414, %v413
    %v433 = vpack.c.b16 %v416, %v415
    %v434 = vpack.c.b16 %v418, %v417
    %v435 = vpack.c.b16 %v420, %v419
    %v436 = vpack.c.b16 %v422, %v421
    %v437 = vpack.c.b16 %v424, %v423
    %v438 = vpack.c.b16 %v426, %v425
    %v439 = vpack.c.b16 %v428, %v427
    %v440 = vpack.c.b16 %v430, %v429
    %v441 = vpack.c.b16 %v431, %v431
    %vm451 = vcmask 154624
    %v453 = vsel %vm451, %v299, 0
    %v456 = vsel %vm451, %v301, 0
    %v459 = vsel %vm451, %v303, 0
    %v462 = vsel %vm451, %v305, 0
    %v465 = vsel %vm451, %v307, 0
    %v468 = vsel %vm451, %v309, 0
    %v471 = vsel %vm451, %v311, 0
    %v474 = vsel %vm451, %v313, 0
    %v477 = vsel %vm451, %v315, 0
    %v480 = vsel %vm451, %v317, 0
    %v483 = vsel %vm451, %v319, 0
    %v486 = vsel %vm451, %v321, 0
    %v489 = vsel %vm451, %v323, 0
    %v492 = vsel %vm451, %v325, 0
    %v495 = vsel %vm451, %v327, 0
    %v498 = vsel %vm451, %v329, 0
    %v501 = vsel %vm451, %v331, 0
    %v504 = vsel %vm451, %v333, 0
    %v507 = vsel %vm451, %v335, 0
    %v510 = vsel %vm451, %v337, 0
    %v513 = vsel %vm451, %v339, 0
    %v516 = vsel %vm451, %v341, 0
    %v519 = vsel %vm451, %v343, 0
    %v522 = vsel %vm451, %v345, 0
    %v525 = vsel %vm451, %v347, 0
    %v528 = vsel %vm451, %v349, 0
    %v531 = vsel %vm451, %v351, 0
    %v534 = vsel %vm451, %v353, 0
    %v537 = vsel %vm451, %v355, 0
    %v540 = vsel %vm451, %v357, 0
    %v543 = vsel %vm451, %v359, 0
    %v546 = vsel %vm451, %v361, 0
    %vm548 = vcmask 1040384
    %vm549 = vcmask 1041408
    %v550 = vsel %vm548, 4294967295, 65535
    %v551 = vsel %vm549, %v550, 0
    %v553 = vand.u32 %v441, %v551
    %555 = vmatprep.subr.bf16.mxu0 0
    %556 = vmatpush1.bf16.msra.mxu0 %v432
    %557 = vmatprep.subr.bf16.mxu0 0
    %558 = vmatpush1.bf16.msra.mxu0 %v433
    %559 = vmatprep.subr.bf16.mxu0 0
    %560 = vmatpush1.bf16.msra.mxu0 %v434
    %561 = vmatprep.subr.bf16.mxu0 0
    %562 = vmatpush1.bf16.msra.mxu0 %v435
    %563 = vmatprep.subr.bf16.mxu0 0
    %564 = vmatpush1.bf16.msra.mxu0 %v436
    %565 = vmatprep.subr.bf16.mxu0 0
    %566 = vmatpush1.bf16.msra.mxu0 %v437
    %567 = vmatprep.subr.bf16.mxu0 0
    %568 = vmatpush1.bf16.msra.mxu0 %v438
    %569 = vmatprep.subr.bf16.mxu0 0
    %570 = vmatpush1.bf16.msra.mxu0 %v439
    %571 = vmatprep.subr.bf16.mxu0 0
    %572 = vmatpush1.bf16.msra.mxu0 %v440
    %573 = vmatprep.subr.bf16.mxu0 0
    %574 = vmatpush1.bf16.msra.mxu0 %v553
    %575 = vmatprep.subr.bf16.mxu0 0
    %576 = vmatpush1.bf16.msra.mxu0 0
    %577 = vmatprep.subr.bf16.mxu0 0
    %578 = vmatpush1.bf16.msra.mxu0 0
    %579 = vmatprep.subr.bf16.mxu0 0
    %580 = vmatpush1.bf16.msra.mxu0 0
    %581 = vmatprep.subr.bf16.mxu0 0
    %582 = vmatpush1.bf16.msra.mxu0 0
    %583 = vmatprep.subr.bf16.mxu0 0
    %584 = vmatpush1.bf16.msra.mxu0 0
    %585 = vmatprep.subr.bf16.mxu0 0
    %586 = vmatpush1.bf16.msra.mxu0 0
    %587 = vmatprep.mubr.bf16.mxu0 %v453
    %588 = vmatmul.mubr.bf16.gmra.mrb[0].mxu0 %v298
    %v589 = vpop.f32.mrb[0].mxu0
    %v590 = vadd.f32 %v104, %v589
    %v591 = vpop.f32.mrb[0].mxu0
    %v592 = vpop.f32.mrb[0].mxu0
    %v593 = vadd.f32 %v104, %v592
    %v594 = vpop.f32.mrb[0].mxu0
    %595 = vmatprep.mubr.bf16.mxu0 %v456
    %596 = vmatmul.mubr.bf16.gmra.mrb[0].mxu0 %v300
    %v597 = vpop.f32.mrb[0].mxu0
    %v598 = vadd.f32 %v104, %v597
    %v599 = vpop.f32.mrb[0].mxu0
    %v600 = vpop.f32.mrb[0].mxu0
    %v601 = vadd.f32 %v104, %v600
    %v602 = vpop.f32.mrb[0].mxu0
    %603 = vmatprep.mubr.bf16.mxu0 %v459
    %604 = vmatmul.mubr.bf16.gmra.mrb[0].mxu0 %v302
    %v605 = vpop.f32.mrb[0].mxu0
    %v606 = vadd.f32 %v104, %v605
    %v607 = vpop.f32.mrb[0].mxu0
    %v608 = vpop.f32.mrb[0].mxu0
    %v609 = vadd.f32 %v104, %v608
    %v610 = vpop.f32.mrb[0].mxu0
    %611 = vmatprep.mubr.bf16.mxu0 %v462
    %612 = vmatmul.mubr.bf16.gmra.mrb[0].mxu0 %v304
    %v613 = vpop.f32.mrb[0].mxu0
    %v614 = vadd.f32 %v104, %v613
    %v615 = vpop.f32.mrb[0].mxu0
    %v616 = vpop.f32.mrb[0].mxu0
    %v617 = vadd.f32 %v104, %v616
    %v618 = vpop.f32.mrb[0].mxu0
    %619 = vmatprep.mubr.bf16.mxu0 %v465
    %620 = vmatmul.mubr.bf16.gmra.mrb[0].mxu0 %v306
    %v621 = vpop.f32.mrb[0].mxu0
    %v622 = vadd.f32 %v104, %v621
    %v623 = vpop.f32.mrb[0].mxu0
    %v624 = vpop.f32.mrb[0].mxu0
    %v625 = vadd.f32 %v104, %v624
    %v626 = vpop.f32.mrb[0].mxu0
    %627 = vmatprep.mubr.bf16.mxu0 %v468
    %628 = vmatmul.mubr.bf16.gmra.mrb[0].mxu0 %v308
    %v629 = vpop.f32.mrb[0].mxu0
    %v630 = vadd.f32 %v104, %v629
    %v631 = vpop.f32.mrb[0].mxu0
    %v632 = vpop.f32.mrb[0].mxu0
    %v633 = vadd.f32 %v104, %v632
    %v634 = vpop.f32.mrb[0].mxu0
    %635 = vmatprep.mubr.bf16.mxu0 %v471
    %636 = vmatmul.mubr.bf16.gmra.mrb[0].mxu0 %v310
    %v637 = vpop.f32.mrb[0].mxu0
    %v638 = vadd.f32 %v104, %v637
    %v639 = vpop.f32.mrb[0].mxu0
    %v640 = vpop.f32.mrb[0].mxu0
    %v641 = vadd.f32 %v104, %v640
    %v642 = vpop.f32.mrb[0].mxu0
    %643 = vmatprep.mubr.bf16.mxu0 %v474
    %644 = vmatmul.mubr.bf16.gmra.mrb[0].mxu0 %v312
    %v645 = vpop.f32.mrb[0].mxu0
    %v646 = vadd.f32 %v104, %v645
    %v647 = vpop.f32.mrb[0].mxu0
    %v648 = vpop.f32.mrb[0].mxu0
    %v649 = vadd.f32 %v104, %v648
    %v650 = vpop.f32.mrb[0].mxu0
    %651 = vmatprep.mubr.bf16.mxu0 %v477
    %652 = vmatmul.mubr.bf16.gmra.mrb[0].mxu0 %v314
    %v653 = vpop.f32.mrb[0].mxu0
    %v654 = vadd.f32 %v104, %v653
    %v655 = vpop.f32.mrb[0].mxu0
    %v656 = vpop.f32.mrb[0].mxu0
    %v657 = vadd.f32 %v104, %v656
    %v658 = vpop.f32.mrb[0].mxu0
    %659 = vmatprep.mubr.bf16.mxu0 %v480
    %660 = vmatmul.mubr.bf16.gmra.mrb[0].mxu0 %v316
    %v661 = vpop.f32.mrb[0].mxu0
    %v662 = vadd.f32 %v104, %v661
    %v663 = vpop.f32.mrb[0].mxu0
    %v664 = vpop.f32.mrb[0].mxu0
    %v665 = vadd.f32 %v104, %v664
    %v666 = vpop.f32.mrb[0].mxu0
    %667 = vmatprep.mubr.bf16.mxu0 %v483
    %668 = vmatmul.mubr.bf16.gmra.mrb[0].mxu0 %v318
    %v669 = vpop.f32.mrb[0].mxu0
    %v670 = vadd.f32 %v104, %v669
    %v671 = vpop.f32.mrb[0].mxu0
    %v672 = vpop.f32.mrb[0].mxu0
    %v673 = vadd.f32 %v104, %v672
    %v674 = vpop.f32.mrb[0].mxu0
    %675 = vmatprep.mubr.bf16.mxu0 %v486
    %676 = vmatmul.mubr.bf16.gmra.mrb[0].mxu0 %v320
    %v677 = vpop.f32.mrb[0].mxu0
    %v678 = vadd.f32 %v104, %v677
    %v679 = vpop.f32.mrb[0].mxu0
    %v680 = vpop.f32.mrb[0].mxu0
    %v681 = vadd.f32 %v104, %v680
    %v682 = vpop.f32.mrb[0].mxu0
    %683 = vmatprep.mubr.bf16.mxu0 %v489
    %684 = vmatmul.mubr.bf16.gmra.mrb[0].mxu0 %v322
    %v685 = vpop.f32.mrb[0].mxu0
    %v686 = vadd.f32 %v104, %v685
    %v687 = vpop.f32.mrb[0].mxu0
    %v688 = vpop.f32.mrb[0].mxu0
    %v689 = vadd.f32 %v104, %v688
    %v690 = vpop.f32.mrb[0].mxu0
    %691 = vmatprep.mubr.bf16.mxu0 %v492
    %692 = vmatmul.mubr.bf16.gmra.mrb[0].mxu0 %v324
    %v693 = vpop.f32.mrb[0].mxu0
    %v694 = vadd.f32 %v104, %v693
    %v695 = vpop.f32.mrb[0].mxu0
    %v696 = vpop.f32.mrb[0].mxu0
    %v697 = vadd.f32 %v104, %v696
    %v698 = vpop.f32.mrb[0].mxu0
    %699 = vmatprep.mubr.bf16.mxu0 %v495
    %700 = vmatmul.mubr.bf16.gmra.mrb[0].mxu0 %v326
    %v701 = vpop.f32.mrb[0].mxu0
    %v702 = vadd.f32 %v104, %v701
    %v703 = vpop.f32.mrb[0].mxu0
    %v704 = vpop.f32.mrb[0].mxu0
    %v705 = vadd.f32 %v104, %v704
    %v706 = vpop.f32.mrb[0].mxu0
    %707 = vmatprep.mubr.bf16.mxu0 %v498
    %708 = vmatmul.mubr.bf16.gmra.mrb[0].mxu0 %v328
    %v709 = vpop.f32.mrb[0].mxu0
    %v710 = vadd.f32 %v104, %v709
    %v711 = vpop.f32.mrb[0].mxu0
    %v712 = vpop.f32.mrb[0].mxu0
    %v713 = vadd.f32 %v104, %v712
    %v714 = vpop.f32.mrb[0].mxu0
    %715 = vmatprep.mubr.bf16.mxu0 %v501
    %716 = vmatmul.mubr.bf16.gmra.mrb[0].mxu0 %v330
    %v717 = vpop.f32.mrb[0].mxu0
    %v718 = vadd.f32 %v104, %v717
    %v719 = vpop.f32.mrb[0].mxu0
    %v720 = vpop.f32.mrb[0].mxu0
    %v721 = vadd.f32 %v104, %v720
    %v722 = vpop.f32.mrb[0].mxu0
    %723 = vmatprep.mubr.bf16.mxu0 %v504
    %724 = vmatmul.mubr.bf16.gmra.mrb[0].mxu0 %v332
    %v725 = vpop.f32.mrb[0].mxu0
    %v726 = vadd.f32 %v104, %v725
    %v727 = vpop.f32.mrb[0].mxu0
    %v728 = vpop.f32.mrb[0].mxu0
    %v729 = vadd.f32 %v104, %v728
    %v730 = vpop.f32.mrb[0].mxu0
    %731 = vmatprep.mubr.bf16.mxu0 %v507
    %732 = vmatmul.mubr.bf16.gmra.mrb[0].mxu0 %v334
    %v733 = vpop.f32.mrb[0].mxu0
    %v734 = vadd.f32 %v104, %v733
    %v735 = vpop.f32.mrb[0].mxu0
    %v736 = vpop.f32.mrb[0].mxu0
    %v737 = vadd.f32 %v104, %v736
    %v738 = vpop.f32.mrb[0].mxu0
    %739 = vmatprep.mubr.bf16.mxu0 %v510
    %740 = vmatmul.mubr.bf16.gmra.mrb[0].mxu0 %v336
    %v741 = vpop.f32.mrb[0].mxu0
    %v742 = vadd.f32 %v104, %v741
    %v743 = vpop.f32.mrb[0].mxu0
    %v744 = vpop.f32.mrb[0].mxu0
    %v745 = vadd.f32 %v104, %v744
    %v746 = vpop.f32.mrb[0].mxu0
    %747 = vmatprep.mubr.bf16.mxu0 %v513
    %748 = vmatmul.mubr.bf16.gmra.mrb[0].mxu0 %v338
    %v749 = vpop.f32.mrb[0].mxu0
    %v750 = vadd.f32 %v104, %v749
    %v751 = vpop.f32.mrb[0].mxu0
    %v752 = vpop.f32.mrb[0].mxu0
    %v753 = vadd.f32 %v104, %v752
    %v754 = vpop.f32.mrb[0].mxu0
    %755 = vmatprep.mubr.bf16.mxu0 %v516
    %756 = vmatmul.mubr.bf16.gmra.mrb[0].mxu0 %v340
    %v757 = vpop.f32.mrb[0].mxu0
    %v758 = vadd.f32 %v104, %v757
    %v759 = vpop.f32.mrb[0].mxu0
    %v760 = vpop.f32.mrb[0].mxu0
    %v761 = vadd.f32 %v104, %v760
    %v762 = vpop.f32.mrb[0].mxu0
    %763 = vmatprep.mubr.bf16.mxu0 %v519
    %764 = vmatmul.mubr.bf16.gmra.mrb[0].mxu0 %v342
    %v765 = vpop.f32.mrb[0].mxu0
    %v766 = vadd.f32 %v104, %v765
    %v767 = vpop.f32.mrb[0].mxu0
    %v768 = vpop.f32.mrb[0].mxu0
    %v769 = vadd.f32 %v104, %v768
    %v770 = vpop.f32.mrb[0].mxu0
    %771 = vmatprep.mubr.bf16.mxu0 %v522
    %772 = vmatmul.mubr.bf16.gmra.mrb[0].mxu0 %v344
    %v773 = vpop.f32.mrb[0].mxu0
    %v774 = vadd.f32 %v104, %v773
    %v775 = vpop.f32.mrb[0].mxu0
    %v776 = vpop.f32.mrb[0].mxu0
    %v777 = vadd.f32 %v104, %v776
    %v778 = vpop.f32.mrb[0].mxu0
    %779 = vmatprep.mubr.bf16.mxu0 %v525
    %780 = vmatmul.mubr.bf16.gmra.mrb[0].mxu0 %v346
    %v781 = vpop.f32.mrb[0].mxu0
    %v782 = vadd.f32 %v104, %v781
    %v783 = vpop.f32.mrb[0].mxu0
    %v784 = vpop.f32.mrb[0].mxu0
    %v785 = vadd.f32 %v104, %v784
    %v786 = vpop.f32.mrb[0].mxu0
    %787 = vmatprep.mubr.bf16.mxu0 %v528
    %788 = vmatmul.mubr.bf16.gmra.mrb[0].mxu0 %v348
    %v789 = vpop.f32.mrb[0].mxu0
    %v790 = vadd.f32 %v104, %v789
    %v791 = vpop.f32.mrb[0].mxu0
    %v792 = vpop.f32.mrb[0].mxu0
    %v793 = vadd.f32 %v104, %v792
    %v794 = vpop.f32.mrb[0].mxu0
    %795 = vmatprep.mubr.bf16.mxu0 %v531
    %796 = vmatmul.mubr.bf16.gmra.mrb[0].mxu0 %v350
    %v797 = vpop.f32.mrb[0].mxu0
    %v798 = vadd.f32 %v104, %v797
    %v799 = vpop.f32.mrb[0].mxu0
    %v800 = vpop.f32.mrb[0].mxu0
    %v801 = vadd.f32 %v104, %v800
    %v802 = vpop.f32.mrb[0].mxu0
    %803 = vmatprep.mubr.bf16.mxu0 %v534
    %804 = vmatmul.mubr.bf16.gmra.mrb[0].mxu0 %v352
    %v805 = vpop.f32.mrb[0].mxu0
    %v806 = vadd.f32 %v104, %v805
    %v807 = vpop.f32.mrb[0].mxu0
    %v808 = vpop.f32.mrb[0].mxu0
    %v809 = vadd.f32 %v104, %v808
    %v810 = vpop.f32.mrb[0].mxu0
    %811 = vmatprep.mubr.bf16.mxu0 %v537
    %812 = vmatmul.mubr.bf16.gmra.mrb[0].mxu0 %v354
    %v813 = vpop.f32.mrb[0].mxu0
    %v814 = vadd.f32 %v104, %v813
    %v815 = vpop.f32.mrb[0].mxu0
    %v816 = vpop.f32.mrb[0].mxu0
    %v817 = vadd.f32 %v104, %v816
    %v818 = vpop.f32.mrb[0].mxu0
    %819 = vmatprep.mubr.bf16.mxu0 %v540
    %820 = vmatmul.mubr.bf16.gmra.mrb[0].mxu0 %v356
    %v821 = vpop.f32.mrb[0].mxu0
    %v822 = vadd.f32 %v104, %v821
    %v823 = vpop.f32.mrb[0].mxu0
    %v824 = vpop.f32.mrb[0].mxu0
    %v825 = vadd.f32 %v104, %v824
    %v826 = vpop.f32.mrb[0].mxu0
    %827 = vmatprep.mubr.bf16.mxu0 %v543
    %828 = vmatmul.mubr.bf16.gmra.mrb[0].mxu0 %v358
    %v829 = vpop.f32.mrb[0].mxu0
    %v830 = vadd.f32 %v104, %v829
    %v831 = vpop.f32.mrb[0].mxu0
    %v832 = vpop.f32.mrb[0].mxu0
    %v833 = vadd.f32 %v104, %v832
    %v834 = vpop.f32.mrb[0].mxu0
    %835 = vmatprep.mubr.bf16.mxu0 %v546
    %836 = vmatmul.mubr.bf16.gmra.mrb[0].mxu0 %v360
    %v837 = vpop.f32.mrb[0].mxu0
    %v838 = vadd.f32 %v104, %v837
    %v839 = vpop.f32.mrb[0].mxu0
    %v840 = vpop.f32.mrb[0].mxu0
    %v841 = vadd.f32 %v104, %v840
    %v842 = vpop.f32.mrb[0].mxu0
    %843 = vdwg.mxu0
    %v844 = vmax.f32 %v590, 0.0
    %v845 = vmax.f32 %v593, 0.0
    %v846 = vmax.f32 %v598, 0.0
    %v847 = vmax.f32 %v601, 0.0
    %v848 = vmax.f32 %v606, 0.0
    %v849 = vmax.f32 %v609, 0.0
    %v850 = vmax.f32 %v614, 0.0
    %v851 = vmax.f32 %v617, 0.0
    %v852 = vmax.f32 %v622, 0.0
    %v853 = vmax.f32 %v625, 0.0
    %v854 = vmax.f32 %v630, 0.0
    %v855 = vmax.f32 %v633, 0.0
    %v856 = vmax.f32 %v638, 0.0
    %v857 = vmax.f32 %v641, 0.0
    %v858 = vmax.f32 %v646, 0.0
    %v859 = vmax.f32 %v649, 0.0
    %v860 = vmax.f32 %v654, 0.0
    %v861 = vmax.f32 %v657, 0.0
    %v862 = vmax.f32 %v662, 0.0
    %v863 = vmax.f32 %v665, 0.0
    %v864 = vmax.f32 %v670, 0.0
    %v865 = vmax.f32 %v673, 0.0
    %v866 = vmax.f32 %v678, 0.0
    %v867 = vmax.f32 %v681, 0.0
    %v868 = vmax.f32 %v686, 0.0
    %v869 = vmax.f32 %v689, 0.0
    %v870 = vmax.f32 %v694, 0.0
    %v871 = vmax.f32 %v697, 0.0
    %v872 = vmax.f32 %v702, 0.0
    %v873 = vmax.f32 %v705, 0.0
    %v874 = vmax.f32 %v710, 0.0
    %v875 = vmax.f32 %v713, 0.0
    %v876 = vmax.f32 %v718, 0.0
    %v877 = vmax.f32 %v721, 0.0
    %v878 = vmax.f32 %v726, 0.0
    %v879 = vmax.f32 %v729, 0.0
    %v880 = vmax.f32 %v734, 0.0
    %v881 = vmax.f32 %v737, 0.0
    %v882 = vmax.f32 %v742, 0.0
    %v883 = vmax.f32 %v745, 0.0
    %v884 = vmax.f32 %v750, 0.0
    %v885 = vmax.f32 %v753, 0.0
    %v886 = vmax.f32 %v758, 0.0
    %v887 = vmax.f32 %v761, 0.0
    %v888 = vmax.f32 %v766, 0.0
    %v889 = vmax.f32 %v769, 0.0
    %v890 = vmax.f32 %v774, 0.0
    %v891 = vmax.f32 %v777, 0.0
    %v892 = vmax.f32 %v782, 0.0
    %v893 = vmax.f32 %v785, 0.0
    %v894 = vmax.f32 %v790, 0.0
    %v895 = vmax.f32 %v793, 0.0
    %v896 = vmax.f32 %v798, 0.0
    %v897 = vmax.f32 %v801, 0.0
    %v898 = vmax.f32 %v806, 0.0
    %v899 = vmax.f32 %v809, 0.0
    %v900 = vmax.f32 %v814, 0.0
    %v901 = vmax.f32 %v817, 0.0
    %v902 = vmax.f32 %v822, 0.0
    %v903 = vmax.f32 %v825, 0.0
    %v904 = vmax.f32 %v830, 0.0
    %v905 = vmax.f32 %v833, 0.0
    %v906 = vmax.f32 %v838, 0.0
    %v907 = vmax.f32 %v841, 0.0
    %v908 = vpack.c.bf16 %v845, %v844
    %v909 = vpack.c.bf16 %v847, %v846
    %v910 = vpack.c.bf16 %v849, %v848
    %v911 = vpack.c.bf16 %v851, %v850
    %v912 = vpack.c.bf16 %v853, %v852
    %v913 = vpack.c.bf16 %v855, %v854
    %v914 = vpack.c.bf16 %v857, %v856
    %v915 = vpack.c.bf16 %v859, %v858
    %v916 = vpack.c.bf16 %v861, %v860
    %v917 = vpack.c.bf16 %v863, %v862
    %v918 = vpack.c.bf16 %v865, %v864
    %v919 = vpack.c.bf16 %v867, %v866
    %v920 = vpack.c.bf16 %v869, %v868
    %v921 = vpack.c.bf16 %v871, %v870
    %v922 = vpack.c.bf16 %v873, %v872
    %v923 = vpack.c.bf16 %v875, %v874
    %v924 = vpack.c.bf16 %v877, %v876
    %v925 = vpack.c.bf16 %v879, %v878
    %v926 = vpack.c.bf16 %v881, %v880
    %v927 = vpack.c.bf16 %v883, %v882
    %v928 = vpack.c.bf16 %v885, %v884
    %v929 = vpack.c.bf16 %v887, %v886
    %v930 = vpack.c.bf16 %v889, %v888
    %v931 = vpack.c.bf16 %v891, %v890
    %v932 = vpack.c.bf16 %v893, %v892
    %v933 = vpack.c.bf16 %v895, %v894
    %v934 = vpack.c.bf16 %v897, %v896
    %v935 = vpack.c.bf16 %v899, %v898
    %v936 = vpack.c.bf16 %v901, %v900
    %v937 = vpack.c.bf16 %v903, %v902
    %v938 = vpack.c.bf16 %v905, %v904
    %v939 = vpack.c.bf16 %v907, %v906
    %v972 = vunpack.c.l.b16 %v908
    %v973 = vunpack.c.h.b16 %v908
    %v974 = vunpack.c.l.b16 %v909
    %v975 = vunpack.c.h.b16 %v909
    %v976 = vunpack.c.l.b16 %v910
    %v977 = vunpack.c.h.b16 %v910
    %v978 = vunpack.c.l.b16 %v911
    %v979 = vunpack.c.h.b16 %v911
    %v980 = vunpack.c.l.b16 %v912
    %v981 = vunpack.c.h.b16 %v912
    %v982 = vunpack.c.l.b16 %v913
    %v983 = vunpack.c.h.b16 %v913
    %v984 = vunpack.c.l.b16 %v914
    %v985 = vunpack.c.h.b16 %v914
    %v986 = vunpack.c.l.b16 %v915
    %v987 = vunpack.c.h.b16 %v915
    %v988 = vunpack.c.l.b16 %v916
    %v989 = vunpack.c.h.b16 %v916
    %v990 = vunpack.c.l.b16 %v917
    %v991 = vunpack.c.h.b16 %v917
    %v992 = vunpack.c.l.b16 %v918
    %v993 = vunpack.c.h.b16 %v918
    %v994 = vunpack.c.l.b16 %v919
    %v995 = vunpack.c.h.b16 %v919
    %v996 = vunpack.c.l.b16 %v920
    %v997 = vunpack.c.h.b16 %v920
    %v998 = vunpack.c.l.b16 %v921
    %v999 = vunpack.c.h.b16 %v921
    %v1000 = vunpack.c.l.b16 %v922
    %v1001 = vunpack.c.h.b16 %v922
    %v1002 = vunpack.c.l.b16 %v923
    %v1003 = vunpack.c.h.b16 %v923
    %v1004 = vunpack.c.l.b16 %v924
    %v1005 = vunpack.c.h.b16 %v924
    %v1006 = vunpack.c.l.b16 %v925
    %v1007 = vunpack.c.h.b16 %v925
    %v1008 = vunpack.c.l.b16 %v926
    %v1009 = vunpack.c.h.b16 %v926
    %v1010 = vunpack.c.l.b16 %v927
    %v1011 = vunpack.c.h.b16 %v927
    %v1012 = vunpack.c.l.b16 %v928
    %v1013 = vunpack.c.h.b16 %v928
    %v1014 = vunpack.c.l.b16 %v929
    %v1015 = vunpack.c.h.b16 %v929
    %v1016 = vunpack.c.l.b16 %v930
    %v1017 = vunpack.c.h.b16 %v930
    %v1018 = vunpack.c.l.b16 %v931
    %v1019 = vunpack.c.h.b16 %v931
    %v1020 = vunpack.c.l.b16 %v932
    %v1021 = vunpack.c.h.b16 %v932
    %v1022 = vunpack.c.l.b16 %v933
    %v1023 = vunpack.c.h.b16 %v933
    %v1024 = vunpack.c.l.b16 %v934
    %v1025 = vunpack.c.h.b16 %v934
    %v1026 = vunpack.c.l.b16 %v935
    %v1027 = vunpack.c.h.b16 %v935
    %v1028 = vunpack.c.l.b16 %v936
    %v1029 = vunpack.c.h.b16 %v936
    %v1030 = vunpack.c.l.b16 %v937
    %v1031 = vunpack.c.h.b16 %v937
    %v1032 = vunpack.c.l.b16 %v938
    %v1033 = vunpack.c.h.b16 %v938
    %v1034 = vunpack.c.l.b16 %v939
    %v1035 = vunpack.c.h.b16 %v939
    %v1036 = vpack.c.b16 %v972, %v972
    %v1037 = vpack.c.b16 %v973, %v973
    %v1038 = vpack.c.b16 %v974, %v974
    %v1039 = vpack.c.b16 %v975, %v975
    %v1040 = vpack.c.b16 %v976, %v976
    %v1041 = vpack.c.b16 %v977, %v977
    %v1042 = vpack.c.b16 %v978, %v978
    %v1043 = vpack.c.b16 %v979, %v979
    %v1044 = vpack.c.b16 %v980, %v980
    %v1045 = vpack.c.b16 %v981, %v981
    %v1046 = vpack.c.b16 %v982, %v982
    %v1047 = vpack.c.b16 %v983, %v983
    %v1048 = vpack.c.b16 %v984, %v984
    %v1049 = vpack.c.b16 %v985, %v985
    %v1050 = vpack.c.b16 %v986, %v986
    %v1051 = vpack.c.b16 %v987, %v987
    %v1052 = vpack.c.b16 %v988, %v988
    %v1053 = vpack.c.b16 %v989, %v989
    %v1054 = vpack.c.b16 %v990, %v990
    %v1055 = vpack.c.b16 %v991, %v991
    %v1056 = vpack.c.b16 %v992, %v992
    %v1057 = vpack.c.b16 %v993, %v993
    %v1058 = vpack.c.b16 %v994, %v994
    %v1059 = vpack.c.b16 %v995, %v995
    %v1060 = vpack.c.b16 %v996, %v996
    %v1061 = vpack.c.b16 %v997, %v997
    %v1062 = vpack.c.b16 %v998, %v998
    %v1063 = vpack.c.b16 %v999, %v999
    %v1064 = vpack.c.b16 %v1000, %v1000
    %v1065 = vpack.c.b16 %v1001, %v1001
    %v1066 = vpack.c.b16 %v1002, %v1002
    %v1067 = vpack.c.b16 %v1003, %v1003
    %v1068 = vpack.c.b16 %v1004, %v1004
    %v1069 = vpack.c.b16 %v1005, %v1005
    %v1070 = vpack.c.b16 %v1006, %v1006
    %v1071 = vpack.c.b16 %v1007, %v1007
    %v1072 = vpack.c.b16 %v1008, %v1008
    %v1073 = vpack.c.b16 %v1009, %v1009
    %v1074 = vpack.c.b16 %v1010, %v1010
    %v1075 = vpack.c.b16 %v1011, %v1011
    %v1076 = vpack.c.b16 %v1012, %v1012
    %v1077 = vpack.c.b16 %v1013, %v1013
    %v1078 = vpack.c.b16 %v1014, %v1014
    %v1079 = vpack.c.b16 %v1015, %v1015
    %v1080 = vpack.c.b16 %v1016, %v1016
    %v1081 = vpack.c.b16 %v1017, %v1017
    %v1082 = vpack.c.b16 %v1018, %v1018
    %v1083 = vpack.c.b16 %v1019, %v1019
    %v1084 = vpack.c.b16 %v1020, %v1020
    %v1085 = vpack.c.b16 %v1021, %v1021
    %v1086 = vpack.c.b16 %v1022, %v1022
    %v1087 = vpack.c.b16 %v1023, %v1023
    %v1088 = vpack.c.b16 %v1024, %v1024
    %v1089 = vpack.c.b16 %v1025, %v1025
    %v1090 = vpack.c.b16 %v1026, %v1026
    %v1091 = vpack.c.b16 %v1027, %v1027
    %v1092 = vpack.c.b16 %v1028, %v1028
    %v1093 = vpack.c.b16 %v1029, %v1029
    %v1094 = vpack.c.b16 %v1030, %v1030
    %v1095 = vpack.c.b16 %v1031, %v1031
    %v1096 = vpack.c.b16 %v1032, %v1032
    %v1097 = vpack.c.b16 %v1033, %v1033
    %v1098 = vpack.c.b16 %v1034, %v1034
    %v1099 = vpack.c.b16 %v1035, %v1035
    %1164 = vst [vmem:[#allocation2] sm:$0xf] %v1036
    %1165 = vst [vmem:[#allocation2 + $0x4] sm:$0xf] %v1037
    %1166 = vst [vmem:[#allocation2 + $0x8] sm:$0xf] %v1038
    %1167 = vst [vmem:[#allocation2 + $0xc] sm:$0xf] %v1039
    %1168 = vst [vmem:[#allocation2 + $0x10] sm:$0xf] %v1040
    %1169 = vst [vmem:[#allocation2 + $0x14] sm:$0xf] %v1041
    %1170 = vst [vmem:[#allocation2 + $0x18] sm:$0xf] %v1042
    %1171 = vst [vmem:[#allocation2 + $0x1c] sm:$0xf] %v1043
    %1172 = vst [vmem:[#allocation2 + $0x20] sm:$0xf] %v1044
    %1173 = vst [vmem:[#allocation2 + $0x24] sm:$0xf] %v1045
    %1174 = vst [vmem:[#allocation2 + $0x28] sm:$0xf] %v1046
    %1175 = vst [vmem:[#allocation2 + $0x2c] sm:$0xf] %v1047
    %1176 = vst [vmem:[#allocation2 + $0x30] sm:$0xf] %v1048
    %1177 = vst [vmem:[#allocation2 + $0x34] sm:$0xf] %v1049
    %1178 = vst [vmem:[#allocation2 + $0x38] sm:$0xf] %v1050
    %1179 = vst [vmem:[#allocation2 + $0x3c] sm:$0xf] %v1051
    %1180 = vst [vmem:[#allocation2 + $0x40] sm:$0xf] %v1052
    %1181 = vst [vmem:[#allocation2 + $0x44] sm:$0xf] %v1053
    %1182 = vst [vmem:[#allocation2 + $0x48] sm:$0xf] %v1054
    %1183 = vst [vmem:[#allocation2 + $0x4c] sm:$0xf] %v1055
    %1184 = vst [vmem:[#allocation2 + $0x50] sm:$0xf] %v1056
    %1185 = vst [vmem:[#allocation2 + $0x54] sm:$0xf] %v1057
    %1186 = vst [vmem:[#allocation2 + $0x58] sm:$0xf] %v1058
    %1187 = vst [vmem:[#allocation2 + $0x5c] sm:$0xf] %v1059
    %1188 = vst [vmem:[#allocation2 + $0x60] sm:$0xf] %v1060
    %1189 = vst [vmem:[#allocation2 + $0x64] sm:$0xf] %v1061
    %1190 = vst [vmem:[#allocation2 + $0x68] sm:$0xf] %v1062
    %1191 = vst [vmem:[#allocation2 + $0x6c] sm:$0xf] %v1063
    %1192 = vst [vmem:[#allocation2 + $0x70] sm:$0xf] %v1064
    %1193 = vst [vmem:[#allocation2 + $0x74] sm:$0xf] %v1065
    %1194 = vst [vmem:[#allocation2 + $0x78] sm:$0xf] %v1066
    %1195 = vst [vmem:[#allocation2 + $0x7c] sm:$0xf] %v1067
    %1196 = vst [vmem:[#allocation2 + $0x80] sm:$0xf] %v1068
    %1197 = vst [vmem:[#allocation2 + $0x84] sm:$0xf] %v1069
    %1198 = vst [vmem:[#allocation2 + $0x88] sm:$0xf] %v1070
    %1199 = vst [vmem:[#allocation2 + $0x8c] sm:$0xf] %v1071
    %1200 = vst [vmem:[#allocation2 + $0x90] sm:$0xf] %v1072
    %1201 = vst [vmem:[#allocation2 + $0x94] sm:$0xf] %v1073
    %1202 = vst [vmem:[#allocation2 + $0x98] sm:$0xf] %v1074
    %1203 = vst [vmem:[#allocation2 + $0x9c] sm:$0xf] %v1075
    %1204 = vst [vmem:[#allocation2 + $0xa0] sm:$0xf] %v1076
    %1205 = vst [vmem:[#allocation2 + $0xa4] sm:$0xf] %v1077
    %1206 = vst [vmem:[#allocation2 + $0xa8] sm:$0xf] %v1078
    %1207 = vst [vmem:[#allocation2 + $0xac] sm:$0xf] %v1079
    %1208 = vst [vmem:[#allocation2 + $0xb0] sm:$0xf] %v1080
    %1209 = vst [vmem:[#allocation2 + $0xb4] sm:$0xf] %v1081
    %1210 = vst [vmem:[#allocation2 + $0xb8] sm:$0xf] %v1082
    %1211 = vst [vmem:[#allocation2 + $0xbc] sm:$0xf] %v1083
    %1212 = vst [vmem:[#allocation2 + $0xc0] sm:$0xf] %v1084
    %1213 = vst [vmem:[#allocation2 + $0xc4] sm:$0xf] %v1085
    %1214 = vst [vmem:[#allocation2 + $0xc8] sm:$0xf] %v1086
    %1215 = vst [vmem:[#allocation2 + $0xcc] sm:$0xf] %v1087
    %1216 = vst [vmem:[#allocation2 + $0xd0] sm:$0xf] %v1088
    %1217 = vst [vmem:[#allocation2 + $0xd4] sm:$0xf] %v1089
    %1218 = vst [vmem:[#allocation2 + $0xd8] sm:$0xf] %v1090
    %1219 = vst [vmem:[#allocation2 + $0xdc] sm:$0xf] %v1091
    %1220 = vst [vmem:[#allocation2 + $0xe0] sm:$0xf] %v1092
    %1221 = vst [vmem:[#allocation2 + $0xe4] sm:$0xf] %v1093
    %1222 = vst [vmem:[#allocation2 + $0xe8] sm:$0xf] %v1094
    %1223 = vst [vmem:[#allocation2 + $0xec] sm:$0xf] %v1095
    %1224 = vst [vmem:[#allocation2 + $0xf0] sm:$0xf] %v1096
    %1225 = vst [vmem:[#allocation2 + $0xf4] sm:$0xf] %v1097
    %1226 = vst [vmem:[#allocation2 + $0xf8] sm:$0xf] %v1098
    %1227 = vst [vmem:[#allocation2 + $0xfc] sm:$0xf] %v1099
    // Predicated region
    $region14: #{tpu_custom_call.1} parent=1 // pred_check
      _
    $region15: #{tpu_custom_call.1} parent=1 // pred_check_branch
      %1229 = sbr.rel (0) target = $region17
    $region16: #{tpu_custom_call.1} parent=1 // pred_region
      %s1231 = ssub.s32 4096, 4096
      %1232 = vsyncadd [#allocation3], %s1231
      %s1233 = sshll.u32 [#allocation2], 4
      %s1234 = int_to_ptr.vmem [resolvable:$true] %s1233
      %1239 = dma.vmem_to_hbm [thread:$0]  %s1234, 4096, %s3, [#allocation3], 64, 64, 4
    $region17: #{tpu_custom_call.1} parent=1 // pred_fallthru
      _
    // Predicated region
    $region18: #{tpu_custom_call.1} parent=1 // pred_check
      _
    $region19: #{tpu_custom_call.1} parent=1 // pred_check_branch
      %1241 = sbr.rel (0) target = $region21
    $region20: #{tpu_custom_call.1} parent=1 // pred_region
      %1242 = dma.done [#allocation3], 4096
    $region21: #{tpu_custom_call.1} parent=1 // pred_fallthru
      _
    %1243 = vsyncpa [#allocation3], 1

</llo_original>
